<compile_context>
chip_gen: v5e
topology: v5e:2x2
jax: 0.10.0
libtpu: 0.0.40
codegen_flags: <defaults>
</compile_context>

<pallas_src>
import jax
import jax.numpy as jnp
from jax.experimental import pallas as pl
from jax.experimental.pallas import tpu as pltpu


def _can1d_kernel(fm_ref, w1t_ref, b1_ref, w2t_ref, b2_ref, out_ref):
    """One (Bt, C, L) block of the feature map.

    fm_ref : (Bt, C, L)   feature-map tile
    w1t_ref: (C, Cr)      fc1 weight, pre-transposed
    b1_ref : (1, Cr)      fc1 bias (row vector)
    w2t_ref: (Cr, C)      fc2 weight, pre-transposed
    b2_ref : (1, C)       fc2 bias (row vector)
    out_ref: (Bt, C, L)
    """
    fm = fm_ref[...]                                   # (Bt, C, L)
    bt, _, ell = fm.shape

    # Global avg/max pooling over the length axis.  Sum accumulates in f32
    # (without materializing an f32 copy of the whole tile); max needs no
    # widening — cast the (Bt, C) result only.
    avg = jnp.sum(fm, axis=-1, dtype=jnp.float32) * (1.0 / ell)   # (Bt, C)
    mx = jnp.max(fm, axis=-1).astype(jnp.float32)                 # (Bt, C)

    # Stack both pooled "positions" into one matmul operand.
    pooled = jnp.concatenate([avg, mx], axis=0)        # (2*Bt, C)

    # fc1 (1x1 conv) + ReLU, fc2 (1x1 conv) + sigmoid — one batched matmul each.
    h = jnp.maximum(
        jnp.dot(pooled, w1t_ref[...], preferred_element_type=jnp.float32)
        + b1_ref[...],
        0.0)                                           # (2*Bt, Cr)
    s = jax.nn.sigmoid(
        jnp.dot(h, w2t_ref[...], preferred_element_type=jnp.float32)
        + b2_ref[...])                                 # (2*Bt, C)

    # Sum over the (length-2) position axis, then sigmoid -> channel attention.
    att = jax.nn.sigmoid(s[:bt] + s[bt:])              # (Bt, C)

    # Single fused broadcast-multiply writeback — no intermediate scratch;
    # attention is cast to the feature-map dtype so the big elementwise
    # multiply stays at the input width.
    att_b = att.astype(fm.dtype)[:, :, None]           # (Bt, C, 1)
    out_ref[...] = (fm * att_b).astype(out_ref.dtype)


def complementary_attention_1d(feature_map, w1, b1, w2, b2, *, block_b=None,
                               target_tile_bytes=4 * 1024 * 1024):
    """feature_map: (B, C, L); w1: (C*r, C); b1: (C*r, 1); w2: (C, C*r); b2: (C, 1)."""
    B, C, L = feature_map.shape
    Cr = w1.shape[0]
    itemsize = feature_map.dtype.itemsize

    # --- Batch blocking: pick Bt so each (Bt, C, L) tile is ~a few MiB
    # (amortizes grid-step overhead) while in+out double-buffered tiles stay
    # well inside VMEM on every generation (v7x has only 64 MiB physical).
    if block_b is None:
        per_batch = max(C * L * itemsize, 1)
        block_b = max(1, min(B, target_tile_bytes // per_batch))
    block_b = max(1, min(block_b, B))
    while B % block_b != 0:            # largest divisor of B <= block_b
        block_b -= 1                   # (keeps the grid exact: no ragged blocks,
    Bt = block_b                       #  so max-pooling never sees pad garbage)
    tile_bytes = Bt * C * L * itemsize

    # --- Preprocess parameters once, wrapper-side (not per grid step):
    # pre-transposed weights + row-vector biases for the (2*Bt, C) matmuls.
    w1t = jnp.transpose(w1)            # (C, Cr)
    w2t = jnp.transpose(w2)            # (Cr, C)
    b1r = jnp.reshape(b1, (1, Cr))
    b2r = jnp.reshape(b2, (1, C))

    # in + out, double-buffered (~4x tile) + weights/headroom; cap below the
    # smallest physical VMEM (v7x: 64 MiB) with margin.
    vmem_limit = int(min(48 * 1024 * 1024,
                         max(32 * 1024 * 1024, 5 * tile_bytes)))

    # The op is memory-bound: tell XLA so it can overlap neighbors.
    cost = pl.CostEstimate(
        flops=4 * B * C * Cr + 4 * B * C + 2 * B * C * L,
        transcendentals=3 * B * C,
        bytes_accessed=2 * B * C * L * itemsize,
    )

    return pl.pallas_call(
        _can1d_kernel,
        out_shape=jax.ShapeDtypeStruct((B, C, L), feature_map.dtype),
        grid_spec=pltpu.PrefetchScalarGridSpec(
            num_scalar_prefetch=0,
            grid=(B // Bt,),
            in_specs=[
                pl.BlockSpec((Bt, C, L), lambda b: (b, 0, 0)),
                pl.BlockSpec((C, Cr), lambda b: (0, 0)),
                pl.BlockSpec((1, Cr), lambda b: (0, 0)),
                pl.BlockSpec((Cr, C), lambda b: (0, 0)),
                pl.BlockSpec((1, C), lambda b: (0, 0)),
            ],
            out_specs=pl.BlockSpec((Bt, C, L), lambda b: (b, 0, 0)),
        ),
        compiler_params=pltpu.CompilerParams(
            dimension_semantics=("parallel",),
            vmem_limit_bytes=vmem_limit,
        ),
        cost_estimate=cost,
    )(feature_map, w1t, b1r, w2t, b2r)


def _reference(feature_map, w1, b1, w2, b2):
    """Pure-JAX re-implementation of the PyTorch forward for verification."""
    avg = jnp.mean(feature_map, axis=-1, keepdims=True)         # (B, C, 1)
    mx = jnp.max(feature_map, axis=-1, keepdims=True)           # (B, C, 1)
    x = jnp.concatenate([avg, mx], axis=2)                      # (B, C, 2)
    fc1 = jax.nn.relu(jnp.einsum('oc,bcp->bop', w1, x) + b1[None, :, :])
    fc2 = jax.nn.sigmoid(jnp.einsum('oc,bcp->bop', w2, fc1) + b2[None, :, :])
    att = jax.nn.sigmoid(jnp.sum(fc2, axis=2, keepdims=True))   # (B, C, 1)
    return feature_map * att


if __name__ == "__main__":
    B, C, L = 2, 8, 32
    ratio = 2
    Cr = C * ratio

    key = jax.random.PRNGKey(0)
    k_fm, k_w1, k_b1, k_w2, k_b2 = jax.random.split(key, 5)

    feature_map = jax.random.normal(k_fm, (B, C, L), dtype=jnp.float32)
    # Deterministic synthetic parameters (Conv1d kernel_size=1 -> plain matrices).
    w1 = jax.random.normal(k_w1, (Cr, C), dtype=jnp.float32) * 0.1
    b1 = jax.random.normal(k_b1, (Cr, 1), dtype=jnp.float32) * 0.1
    w2 = jax.random.normal(k_w2, (C, Cr), dtype=jnp.float32) * 0.1
    b2 = jax.random.normal(k_b2, (C, 1), dtype=jnp.float32) * 0.1

    out = complementary_attention_1d(feature_map, w1, b1, w2, b2)
    out = jax.block_until_ready(out)

    ref = _reference(feature_map, w1, b1, w2, b2)
    assert out.shape == (B, C, L)
    assert jnp.allclose(out, ref, atol=1e-5, rtol=1e-5), "mismatch vs reference"

    print("KERNEL_OK")
</pallas_src>

<mosaic_0001>
module attributes {stable_mosaic.version = 11 : i64} {
  func.func @_can1d_kernel(%arg0: i32, %arg1: memref<2x8x32xf32, #tpu.memory_space<vmem>>, %arg2: memref<8x16xf32, #tpu.memory_space<vmem>>, %arg3: memref<1x16xf32, #tpu.memory_space<vmem>>, %arg4: memref<16x8xf32, #tpu.memory_space<vmem>>, %arg5: memref<1x8xf32, #tpu.memory_space<vmem>>, %arg6: memref<2x8x32xf32, #tpu.memory_space<vmem>>) attributes {dimension_semantics = [#tpu.dimension_semantics<parallel>], iteration_bounds = array<i64: 1>, scalar_prefetch = 0 : i64, scratch_operands = 0 : i64, tpu.core_type = #tpu.core_type<tc>, window_params = [{transform_indices = @transform_0, window_bounds = array<i64: 2, 8, 32>}, {pipeline_mode = #tpu.pipeline_mode<synchronous>, transform_indices = @transform_1, window_bounds = array<i64: 8, 16>}, {pipeline_mode = #tpu.pipeline_mode<synchronous>, transform_indices = @transform_2, window_bounds = array<i64: 1, 16>}, {pipeline_mode = #tpu.pipeline_mode<synchronous>, transform_indices = @transform_3, window_bounds = array<i64: 16, 8>}, {pipeline_mode = #tpu.pipeline_mode<synchronous>, transform_indices = @transform_4, window_bounds = array<i64: 1, 8>}, {transform_indices = @transform_5, window_bounds = array<i64: 2, 8, 32>}]} {
    %c0 = arith.constant 0 : index
    %c0_0 = arith.constant 0 : index
    %c0_1 = arith.constant 0 : index
    %0 = vector.load %arg1[%c0, %c0_0, %c0_1] : memref<2x8x32xf32, #tpu.memory_space<vmem>>, vector<2x8x32xf32>
    %cst = arith.constant dense<0.000000e+00> : vector<2x8xf32>
    %1 = vector.multi_reduction <add>, %0, %cst [2] : vector<2x8x32xf32> to vector<2x8xf32>
    %cst_2 = arith.constant 3.125000e-02 : f32
    %2 = vector.broadcast %cst_2 : f32 to vector<2x8xf32>
    %3 = arith.mulf %1, %2 : vector<2x8xf32>
    %cst_3 = arith.constant dense<0xFF800000> : vector<2x8xf32>
    %4 = vector.multi_reduction <maximumf>, %0, %cst_3 [2] : vector<2x8x32xf32> to vector<2x8xf32>
    %5 = tpu.concatenate %3, %4 in 0 : vector<2x8xf32>, vector<2x8xf32> -> vector<4x8xf32>
    %c0_4 = arith.constant 0 : index
    %c0_5 = arith.constant 0 : index
    %6 = vector.load %arg2[%c0_4, %c0_5] : memref<8x16xf32, #tpu.memory_space<vmem>>, vector<8x16xf32>
    %cst_6 = arith.constant dense<0.000000e+00> : vector<4x16xf32>
    %7 = tpu.matmul %5, %6, %cst_6 {dimension_numbers = #tpu.dot_dimension_numbers<[1], [0], [0], [1], [0, 0, 1, 1], [], []>} : vector<4x8xf32>, vector<8x16xf32>, vector<4x16xf32> -> vector<4x16xf32>
    %c0_7 = arith.constant 0 : index
    %c0_8 = arith.constant 0 : index
    %8 = vector.load %arg3[%c0_7, %c0_8] : memref<1x16xf32, #tpu.memory_space<vmem>>, vector<1x16xf32>
    %9 = vector.broadcast %8 : vector<1x16xf32> to vector<4x16xf32>
    %10 = arith.addf %7, %9 : vector<4x16xf32>
    %cst_9 = arith.constant 0.000000e+00 : f32
    %11 = vector.broadcast %cst_9 : f32 to vector<4x16xf32>
    %12 = arith.maximumf %10, %11 : vector<4x16xf32>
    %c0_10 = arith.constant 0 : index
    %c0_11 = arith.constant 0 : index
    %13 = vector.load %arg4[%c0_10, %c0_11] : memref<16x8xf32, #tpu.memory_space<vmem>>, vector<16x8xf32>
    %cst_12 = arith.constant dense<0.000000e+00> : vector<4x8xf32>
    %14 = tpu.matmul %12, %13, %cst_12 {dimension_numbers = #tpu.dot_dimension_numbers<[1], [0], [0], [1], [0, 0, 1, 1], [], []>} : vector<4x16xf32>, vector<16x8xf32>, vector<4x8xf32> -> vector<4x8xf32>
    %c0_13 = arith.constant 0 : index
    %c0_14 = arith.constant 0 : index
    %15 = vector.load %arg5[%c0_13, %c0_14] : memref<1x8xf32, #tpu.memory_space<vmem>>, vector<1x8xf32>
    %16 = vector.broadcast %15 : vector<1x8xf32> to vector<4x8xf32>
    %17 = arith.addf %14, %16 : vector<4x8xf32>
    %18 = arith.negf %17 : vector<4x8xf32>
    %19 = math.exp %18 : vector<4x8xf32>
    %cst_15 = arith.constant 1.000000e+00 : f32
    %20 = vector.broadcast %cst_15 : f32 to vector<4x8xf32>
    %21 = arith.addf %20, %19 : vector<4x8xf32>
    %22 = arith.divf %20, %21 : vector<4x8xf32>
    %23 = vector.extract_strided_slice %22 {offsets = [0, 0], sizes = [2, 8], strides = [1, 1]} : vector<4x8xf32> to vector<2x8xf32>
    %24 = vector.extract_strided_slice %22 {offsets = [2, 0], sizes = [2, 8], strides = [1, 1]} : vector<4x8xf32> to vector<2x8xf32>
    %25 = arith.addf %23, %24 : vector<2x8xf32>
    %26 = arith.negf %25 : vector<2x8xf32>
    %27 = math.exp %26 : vector<2x8xf32>
    %cst_16 = arith.constant 1.000000e+00 : f32
    %28 = vector.broadcast %cst_16 : f32 to vector<2x8xf32>
    %29 = arith.addf %28, %27 : vector<2x8xf32>
    %30 = arith.divf %28, %29 : vector<2x8xf32>
    %31 = vector.shape_cast %30 : vector<2x8xf32> to vector<2x8x1xf32>
    %32 = vector.broadcast %31 : vector<2x8x1xf32> to vector<2x8x32xf32>
    %33 = arith.mulf %0, %32 : vector<2x8x32xf32>
    %c0_17 = arith.constant 0 : index
    %c0_18 = arith.constant 0 : index
    %c0_19 = arith.constant 0 : index
    %34 = vector.load %arg6[%c0_17, %c0_18, %c0_19] : memref<2x8x32xf32, #tpu.memory_space<vmem>>, vector<2x8x32xf32>
    tpu.vector_store %arg6[%c0_17, %c0_18, %c0_19], %33 {strides = array<i32>} : memref<2x8x32xf32, #tpu.memory_space<vmem>>, vector<2x8x32xf32>,
    return
  }
  func.func @transform_0(%arg0: i32) -> (i32, i32, i32) {
    %c0_i32 = arith.constant 0 : i32
    %c0_i32_0 = arith.constant 0 : i32
    %c0_i32_1 = arith.constant 0 : i32
    return %arg0, %c0_i32, %c0_i32_0 : i32, i32, i32
  }
  func.func @transform_1(%arg0: i32) -> (i32, i32) {
    %c0_i32 = arith.constant 0 : i32
    %c0_i32_0 = arith.constant 0 : i32
    %c0_i32_1 = arith.constant 0 : i32
    return %c0_i32, %c0_i32_0 : i32, i32
  }
  func.func @transform_2(%arg0: i32) -> (i32, i32) {
    %c0_i32 = arith.constant 0 : i32
    %c0_i32_0 = arith.constant 0 : i32
    %c0_i32_1 = arith.constant 0 : i32
    return %c0_i32, %c0_i32_0 : i32, i32
  }
  func.func @transform_3(%arg0: i32) -> (i32, i32) {
    %c0_i32 = arith.constant 0 : i32
    %c0_i32_0 = arith.constant 0 : i32
    %c0_i32_1 = arith.constant 0 : i32
    return %c0_i32, %c0_i32_0 : i32, i32
  }
  func.func @transform_4(%arg0: i32) -> (i32, i32) {
    %c0_i32 = arith.constant 0 : i32
    %c0_i32_0 = arith.constant 0 : i32
    %c0_i32_1 = arith.constant 0 : i32
    return %c0_i32, %c0_i32_0 : i32, i32
  }
  func.func @transform_5(%arg0: i32) -> (i32, i32, i32) {
    %c0_i32 = arith.constant 0 : i32
    %c0_i32_0 = arith.constant 0 : i32
    %c0_i32_1 = arith.constant 0 : i32
    return %arg0, %c0_i32, %c0_i32_0 : i32, i32, i32
  }
}

</mosaic_0001>

<llo_original>
// kernel: tpu_custom_call.1
$region0: #{tpu_custom_call.1}
  #allocation0 [shape = 'u32[]', space=smem, size = 0x4, offset = 0x4, fixed_abs, tag = 'smem constant byte address 0x4 - core index']
  #allocation1 [shape = 'u32[72,128]{1,0:T(1,128)}', space=vmem, size = 0x9000, scoped, tag = 'internal scratch']
  %s0 = inlined_call_operand.vmem [shape: f32[2,8,32], index: 0, kind: input, shape index: {}]
  %s1 = inlined_call_operand.vmem [shape: f32[8,16], index: 1, kind: input, shape index: {}]
  %s2 = inlined_call_operand.vmem [shape: f32[1,16], index: 2, kind: input, shape index: {}]
  %s3 = inlined_call_operand.vmem [shape: f32[16,8], index: 3, kind: input, shape index: {}]
  %s4 = inlined_call_operand.vmem [shape: f32[1,8], index: 4, kind: input, shape index: {}]
  %s5 = inlined_call_operand.hbm [shape: f32[2,8,32], index: 5, kind: output, shape index: {}]
  %s6 = sld [smem:[#allocation0]]
  $region30: #{tpu_custom_call.1} parent=0
    _
  %s8 = ssub.s32 1, %s6
  %s9 = scalar_select 0, %s8, %s6
  $region1: #{tpu_custom_call.1} parent=0
    #allocation2 [shape = 'u8[8192]{0}', space=vmem, size = 0x2000, scoped, tag = 'output window, operand 0, single buffered']
    #allocation3 [shape = 's32[1]{0}', space=sflag, size = 0x4, scoped, tag = 'scoped memory for tpu_custom_call.1']
    %10 = vsyncpa [#allocation3], 0
    // Predicated region
    $region2: #{tpu_custom_call.1} parent=1 // pred_check
      _
    $region3: #{tpu_custom_call.1} parent=1 // pred_check_branch
      %12 = sbr.rel (0) target = $region5
    $region4: #{tpu_custom_call.1} parent=1 // pred_region
      _
    $region5: #{tpu_custom_call.1} parent=1 // pred_fallthru
      _
    // Predicated region
    $region6: #{tpu_custom_call.1} parent=1 // pred_check
      _
    $region7: #{tpu_custom_call.1} parent=1 // pred_check_branch
      %14 = sbr.rel (0) target = $region9
    $region8: #{tpu_custom_call.1} parent=1 // pred_region
      _
    $region9: #{tpu_custom_call.1} parent=1 // pred_fallthru
      _
    // Predicated region
    $region10: #{tpu_custom_call.1} parent=1 // pred_check
      _
    $region11: #{tpu_custom_call.1} parent=1 // pred_check_branch
      %16 = sbr.rel (0) target = $region13
    $region12: #{tpu_custom_call.1} parent=1 // pred_region
      _
    $region13: #{tpu_custom_call.1} parent=1 // pred_fallthru
      _
    // Predicated region
    $region14: #{tpu_custom_call.1} parent=1 // pred_check
      _
    $region15: #{tpu_custom_call.1} parent=1 // pred_check_branch
      %18 = sbr.rel (0) target = $region17
    $region16: #{tpu_custom_call.1} parent=1 // pred_region
      _
    $region17: #{tpu_custom_call.1} parent=1 // pred_fallthru
      _
    // Predicated region
    $region18: #{tpu_custom_call.1} parent=1 // pred_check
      _
    $region19: #{tpu_custom_call.1} parent=1 // pred_check_branch
      %20 = sbr.rel (0) target = $region21
    $region20: #{tpu_custom_call.1} parent=1 // pred_region
      _
    $region21: #{tpu_custom_call.1} parent=1 // pred_fallthru
      _
    %v21 = vld [vmem:[%s0] sm:$0xff]
    %v22 = vld [vmem:[%s0 + $0x8] sm:$0xff]
    %vm23 = vcmask 261120
    %v24 = vsel %vm23, %v21, 0.0
    %25 = vadd.xlane.f32.xlu0 %v24
    %v26 = vpop.xlane.xlu0 %25
    %v27 = vsel %vm23, %v22, 0.0
    %28 = vadd.xlane.f32.xlu0 %v27
    %v29 = vpop.xlane.xlu0 %28
    %v30 = vmul.f32 %v26, 0.03125
    %v31 = vmul.f32 %v29, 0.03125
    %v32 = vsel %vm23, %v21, -inf
    %33 = vmax.xlane.f32.xlu0 %v32
    %v34 = vpop.xlane.xlu0 %33
    %v35 = vsel %vm23, %v22, -inf
    %36 = vmax.xlane.f32.xlu0 %v35
    %v37 = vpop.xlane.xlu0 %36
    %v40 = vlaneseq
    %v41 = vand.u32 %v40, 127
    %v42 = vperm.slane %v30, %v41
    %v43 = vperm.slane %v31, %v41
    %vm44 = vcmask 1041409
    %v45 = vsel %vm44, %v43, %v42
    %v49 = vperm.slane %v34, %v41
    %v50 = vperm.slane %v37, %v41
    %vm51 = vcmask 1043459
    %v52 = vsel %vm51, %v50, %v49
    %vm54 = vcmask 1041408
    %v55 = vsel %vm54, %v45, %v52
    %v56 = vld [vmem:[%s1] sm:$0xff]
    %v57 = vld [vmem:[%s2] sm:$0x1]
    %v59 = vperm.slane %v57, 0
    %vm61 = vcmask 64512
    %v63 = vsel %vm61, %v55, 0
    %65 = vmatpush.msra.mxu0 0.0
    %66 = vmatpush.msra.mxu0 0.0
    %67 = vmatpush.msra.mxu0 0.0
    %68 = vmatpush.msra.mxu0 0.0
    %69 = vmatpush.msra.mxu0 0.0
    %70 = vmatpush.msra.mxu0 0.0
    %71 = vmatpush.msra.mxu0 0.0
    %72 = vmatpush.msra.mxu0 0.0
    %73 = vmatpush.msra.mxu0 0.0
    %74 = vmatpush.msra.mxu0 0.0
    %75 = vmatpush.msra.mxu0 0.0
    %76 = vmatpush.msra.mxu0 0.0
    %77 = vmatpush.msra.mxu0 0.0
    %78 = vmatpush.msra.mxu0 0.0
    %79 = vmatpush.msra.mxu0 0.0
    %80 = vmatpush.msra.mxu0 %v56
    %81 = vmatmul.f32.gmra.mxu0 %v63
    %v82 = vpop.f32.mrf.mxu0
    %v83 = vadd.f32 %v59, %v82
    %84 = vdwg.mxu0
    %v85 = vmax.f32 %v83, 0.0
    %v86 = vld [vmem:[%s3] sm:$0xff]
    %v87 = vld [vmem:[%s3 + $0x8] sm:$0xff]
    %v88 = vld [vmem:[%s4] sm:$0x1]
    %v90 = vperm.slane %v88, 0
    %vm92 = vcmask 130048
    %v94 = vsel %vm92, %v85, 0
    %96 = vmatpush.msra.mxu0 0.0
    %97 = vmatpush.msra.mxu0 0.0
    %98 = vmatpush.msra.mxu0 0.0
    %99 = vmatpush.msra.mxu0 0.0
    %100 = vmatpush.msra.mxu0 0.0
    %101 = vmatpush.msra.mxu0 0.0
    %102 = vmatpush.msra.mxu0 0.0
    %103 = vmatpush.msra.mxu0 0.0
    %104 = vmatpush.msra.mxu0 0.0
    %105 = vmatpush.msra.mxu0 0.0
    %106 = vmatpush.msra.mxu0 0.0
    %107 = vmatpush.msra.mxu0 0.0
    %108 = vmatpush.msra.mxu0 0.0
    %109 = vmatpush.msra.mxu0 0.0
    %110 = vmatpush.msra.mxu0 %v87
    %111 = vmatpush.msra.mxu0 %v86
    %112 = vmatmul.f32.gmra.mxu0 %v94
    %v113 = vpop.f32.mrf.mxu0
    %v114 = vadd.f32 %v90, %v113
    %115 = vdwg.mxu0
    %v116 = vxor.u32 %v114, 2147483648
    %v117 = vmul.f32 %v116, 1.442695
    %v118 = vpow.pop %v117
    %v119 = vadd.f32 %v118, 1.0
    %v120 = vrcp.pop %v119
    %v121 = vmul.f32 %v119, %v120
    %v122 = vsub.f32 1.0, %v121
    %v123 = vmul.f32 %v120, %v122
    %v124 = vadd.f32 %v120, %v123
    %vm125 = vweird.f32 %v119
    %vm126 = vweird.f32 %v120
    %vm127 = vmor %vm125, %vm126
    %v128 = vsel %vm127, %v120, %v124
    %v129 = vand.u32 2147483647, %v119
    %vm130 = vcmp.eq.f32.partialorder %v129, 8.507059e+37
    %v131 = vand.u32 %v119, 2147483648
    %v132 = vor.u32 1.1754944e-38, %v131
    %v133 = vsel %vm130, %v132, %v128
    %v134 = vmul.f32 1.0, %v133
    %v136 = vrot.slane %v134, 2
    %v138 = vadd.f32 %v134, %v136
    %v139 = vxor.u32 %v138, 2147483648
    %v140 = vmul.f32 %v139, 1.442695
    %v141 = vpow.pop %v140
    %v142 = vadd.f32 %v141, 1.0
    %v143 = vrcp.pop %v142
    %v144 = vmul.f32 %v142, %v143
    %v145 = vsub.f32 1.0, %v144
    %v146 = vmul.f32 %v143, %v145
    %v147 = vadd.f32 %v143, %v146
    %vm148 = vweird.f32 %v142
    %vm149 = vweird.f32 %v143
    %vm150 = vmor %vm148, %vm149
    %v151 = vsel %vm150, %v143, %v147
    %v152 = vand.u32 2147483647, %v142
    %vm153 = vcmp.eq.f32.partialorder %v152, 8.507059e+37
    %v154 = vand.u32 %v142, 2147483648
    %v155 = vor.u32 1.1754944e-38, %v154
    %v156 = vsel %vm153, %v155, %v151
    %v157 = vmul.f32 1.0, %v156
    %v158 = vperm.slane %v157, 0
    %v159 = vlaneseq
    %v160 = vshrl.u32 %v159, 7
    %162 = vset.pattern.permute.xlu0 %v160
    %163 = vperm.xlu0 %162, %v158
    %v164 = vpop.permute.xlu0 %163
    %v165 = vperm.slane %v157, 1
    %v166 = vlaneseq
    %v167 = vshrl.u32 %v166, 7
    %169 = vset.pattern.permute.xlu0 %v167
    %170 = vperm.xlu0 %169, %v165
    %v171 = vpop.permute.xlu0 %170
    %v172 = vmul.f32 %v21, %v164
    %v173 = vmul.f32 %v22, %v171
    %174 = vst.msk [vmem:[#allocation2] sm:$0xff] %vm23, %v172
    %175 = vst.msk [vmem:[#allocation2 + $0x8] sm:$0xff] %vm23, %v173
    // Predicated region
    $region22: #{tpu_custom_call.1} parent=1 // pred_check
      _
    $region23: #{tpu_custom_call.1} parent=1 // pred_check_branch
      %177 = sbr.rel (0) target = $region25
    $region24: #{tpu_custom_call.1} parent=1 // pred_region
      %179 = vsyncadd [#allocation3], 0
      %s180 = sshll.u32 [#allocation2], 4
      %s181 = int_to_ptr.vmem [resolvable:$true] %s180
      %s182 = sshll.u32 %s5, 4
      %s183 = int_to_ptr.hbm [resolvable:$true] %s182
      %188 = dma.vmem_to_hbm [thread:$0]  %s181, 256, %s183, [#allocation3], 128, 128, 8
    $region25: #{tpu_custom_call.1} parent=1 // pred_fallthru
      _
    // Predicated region
    $region26: #{tpu_custom_call.1} parent=1 // pred_check
      _
    $region27: #{tpu_custom_call.1} parent=1 // pred_check_branch
      %190 = sbr.rel (0) target = $region29
    $region28: #{tpu_custom_call.1} parent=1 // pred_region
      %192 = dma.done [#allocation3], 256
    $region29: #{tpu_custom_call.1} parent=1 // pred_fallthru
      _
    %193 = vsyncpa [#allocation3], 1

</llo_original>
